<compile_context>
chip_gen: v7x
topology: tpu7x:2x2x1
jax: 0.10.0
libtpu: 0.0.40
codegen_flags: <defaults>
</compile_context>

<pallas_src>
import jax
import jax.numpy as jnp
from jax.experimental import pallas as pl
from jax.experimental.pallas import tpu as pltpu

# -------- config (small synthetic dims) --------
BATCH = 8
TEXT_DIM = 32
IMG_DIM = 64
HIDDEN_DIM = 32
CLS_HIDDEN_DIM = 64
NUM_CLASSES = 4
LEAKY_SLOPE = 0.01          # nn.LeakyReLU default
COMPUTE_DTYPE = jnp.bfloat16  # MXU operand dtype (f32 accumulation/elementwise)

LANE = 128                  # padded lane width of every weight panel / output


def _ru(x, m):
    return ((x + m - 1) // m) * m


# Row offsets inside the single packed (ROWS, LANE) weight buffer.
# Multi-row panels and each bias row start on a 16-row boundary (bf16
# sublane-tile granularity), so every read is tile-aligned.
R_WT  = 0                         # wt   panel (TEXT_DIM, 128), real cols 0:H
R_WI  = R_WT + _ru(TEXT_DIM, 16)  # 32   wi   panel (IMG_DIM, 128), real cols 0:H
R_WGT = R_WI + _ru(IMG_DIM, 16)   # 96   ww[:H]  panel (128, 128), real rows 0:H, cols 0:H
R_WGI = R_WGT + LANE              # 224  ww[H:]  panel (128, 128), real rows 0:H, cols 0:H
R_WC1 = R_WGI + LANE              # 352  wc1  panel (128, 128), real rows 0:H, cols 0:CH
R_WC2 = R_WC1 + LANE              # 480  wc2  panel (128, 128), real rows 0:CH, cols 0:NC
R_BT  = R_WC2 + LANE              # 608  bt   (1, 128)
R_BI  = R_BT + 16                 # 624  bi
R_BG  = R_BI + 16                 # 640  bw
R_BC1 = R_BG + 16                 # 656  bc1
R_BC2 = R_BC1 + 16                # 672  bc2
ROWS  = _ru(R_BC2 + 1, 16)        # 688


def tim_kernel(txt_ref, img_ref, w_ref, out_ref):
    f32 = jnp.float32
    cdt = w_ref.dtype  # bf16 MXU operand dtype

    txt = txt_ref[...]                                   # (bt, TEXT_DIM) bf16
    img = img_ref[...]                                   # (bt, IMG_DIM)  bf16

    # Projections: t and i land in the SAME lanes 0:H of two (bt, 128) tensors
    # (padded lanes are exactly zero), so no lane splits are needed later.
    w_t = w_ref[R_WT:R_WT + TEXT_DIM, :]                 # (32, 128)
    w_i = w_ref[R_WI:R_WI + IMG_DIM, :]                  # (64, 128)
    b_t = w_ref[R_BT:R_BT + 1, :].astype(f32)            # (1, 128), pad lanes 0
    b_i = w_ref[R_BI:R_BI + 1, :].astype(f32)
    t = jnp.dot(txt, w_t, preferred_element_type=f32) + b_t   # (bt, 128)
    i = jnp.dot(img, w_i, preferred_element_type=f32) + b_i   # (bt, 128)

    # Gate: sigmoid(concat(t, i) @ ww + bw), done as two K=128 dots against
    # zero-padded halves of ww (padded rows/lanes contribute exactly 0).
    w_gt = w_ref[R_WGT:R_WGT + LANE, :]                  # (128, 128)
    w_gi = w_ref[R_WGI:R_WGI + LANE, :]                  # (128, 128)
    b_g = w_ref[R_BG:R_BG + 1, :].astype(f32)
    gate = jax.nn.sigmoid(
        jnp.dot(t.astype(cdt), w_gt, preferred_element_type=f32)
        + jnp.dot(i.astype(cdt), w_gi, preferred_element_type=f32)
        + b_g)                                           # real lanes 0:H
    # Padded lanes: gate = sigmoid(0) = 0.5, but t = i = 0 there, so the mix
    # below stays exactly zero in padded lanes.
    feature = i + gate * (t - i)                         # (bt, 128), f32

    # Classifier: Linear -> LeakyReLU -> (Dropout = identity, eval) -> Linear.
    w_c1 = w_ref[R_WC1:R_WC1 + LANE, :]                  # (128, 128)
    b_c1 = w_ref[R_BC1:R_BC1 + 1, :].astype(f32)
    h = jnp.dot(feature.astype(cdt), w_c1, preferred_element_type=f32) + b_c1
    h = jnp.maximum(h, LEAKY_SLOPE * h)                  # LeakyReLU (one vmax)

    w_c2 = w_ref[R_WC2:R_WC2 + LANE, :]                  # (128, 128)
    b_c2 = w_ref[R_BC2:R_BC2 + 1, :].astype(f32)
    logits = jnp.dot(h.astype(cdt), w_c2, preferred_element_type=f32) + b_c2

    out_ref[...] = logits.astype(out_ref.dtype)          # lane-dense bf16 store


def pack_params(p, dtype=COMPUTE_DTYPE):
    """Pack all fusion-head weights/biases into one (ROWS, LANE) buffer.

    Call ONCE and keep the result device-resident across forward calls.
    """
    W = jnp.zeros((ROWS, LANE), jnp.float32)
    W = W.at[R_WT:R_WT + TEXT_DIM, 0:HIDDEN_DIM].set(p["wt"])
    W = W.at[R_WI:R_WI + IMG_DIM, 0:HIDDEN_DIM].set(p["wi"])
    W = W.at[R_WGT:R_WGT + HIDDEN_DIM, 0:HIDDEN_DIM].set(p["ww"][:HIDDEN_DIM])
    W = W.at[R_WGI:R_WGI + HIDDEN_DIM, 0:HIDDEN_DIM].set(p["ww"][HIDDEN_DIM:])
    W = W.at[R_WC1:R_WC1 + HIDDEN_DIM, 0:CLS_HIDDEN_DIM].set(p["wc1"])
    W = W.at[R_WC2:R_WC2 + CLS_HIDDEN_DIM, 0:NUM_CLASSES].set(p["wc2"])
    W = W.at[R_BT, 0:HIDDEN_DIM].set(p["bt"][0])
    W = W.at[R_BI, 0:HIDDEN_DIM].set(p["bi"][0])
    W = W.at[R_BG, 0:HIDDEN_DIM].set(p["bw"][0])
    W = W.at[R_BC1, 0:CLS_HIDDEN_DIM].set(p["bc1"][0])
    W = W.at[R_BC2, 0:NUM_CLASSES].set(p["bc2"][0])
    return W.astype(dtype)


def _default_batch_tile(batch):
    # Whole batch at tiny B.  At real B: ~512-row tiles approach the HBM
    # roofline on v5e/v6e, and keeping >=2 grid steps lets the "parallel"
    # batch axis shard across v7x's 2 TensorCores.
    if batch <= 16:
        return batch
    half = _ru(pl.cdiv(batch, 2), 8)
    return max(8, min(512, half))


def _tim_forward_impl(txt_feat, img_feat, w_pack, *, batch_tile=None):
    """txt_feat: (B, TEXT_DIM), img_feat: (B, IMG_DIM) -> (B, NUM_CLASSES) f32."""
    B = txt_feat.shape[0]
    bt = batch_tile if batch_tile is not None else _default_batch_tile(B)
    cdt = w_pack.dtype
    itemsize = jnp.dtype(cdt).itemsize

    txt = txt_feat.astype(cdt)   # halves the dominant activation DMA stream
    img = img_feat.astype(cdt)

    # Explicit scoped-VMEM budget (v5e defaults to 16 MiB, v7x has 64 MiB
    # physical): double-buffered inputs/outputs + resident weights + f32
    # intermediates, with headroom.
    est = (2 * bt * (TEXT_DIM + IMG_DIM) * itemsize
           + 2 * bt * LANE * itemsize
           + 2 * ROWS * LANE * itemsize
           + 8 * bt * LANE * 4)
    vmem_limit = int(min(max(4 * est, 32 * 1024 * 1024), 64 * 1024 * 1024))

    out = pl.pallas_call(
        tim_kernel,
        out_shape=jax.ShapeDtypeStruct((B, LANE), cdt),
        grid_spec=pltpu.PrefetchScalarGridSpec(
            num_scalar_prefetch=0,
            grid=(pl.cdiv(B, bt),),
            in_specs=[
                pl.BlockSpec((bt, TEXT_DIM), lambda b: (b, 0)),   # txt, batch-tiled
                pl.BlockSpec((bt, IMG_DIM), lambda b: (b, 0)),    # img, batch-tiled
                # Constant block index -> Pallas skips the re-DMA between
                # consecutive grid steps; the packed weights stay resident.
                pl.BlockSpec((ROWS, LANE), lambda b: (0, 0)),
            ],
            out_specs=pl.BlockSpec((bt, LANE), lambda b: (b, 0)),  # lane-dense bf16
        ),
        compiler_params=pltpu.CompilerParams(
            dimension_semantics=("parallel",),
            vmem_limit_bytes=vmem_limit),
    )(txt, img, w_pack)

    return out[:, :NUM_CLASSES].astype(jnp.float32)


tim_forward = jax.jit(_tim_forward_impl, static_argnames=("batch_tile",))


def reference_forward(txt_feat, img_feat, p):
    t = txt_feat @ p["wt"] + p["bt"]
    i = img_feat @ p["wi"] + p["bi"]
    w = jax.nn.sigmoid(jnp.concatenate([t, i], axis=-1) @ p["ww"] + p["bw"])
    f = w * t + (1.0 - w) * i
    h = f @ p["wc1"] + p["bc1"]
    h = jnp.where(h >= 0.0, h, LEAKY_SLOPE * h)
    return h @ p["wc2"] + p["bc2"]


def init_params(key):
    ks = jax.random.split(key, 5)

    def lin(k, fan_in, fan_out):
        bound = 1.0 / jnp.sqrt(fan_in)
        kw, kb = jax.random.split(k)
        w = jax.random.uniform(kw, (fan_in, fan_out), jnp.float32, -bound, bound)
        b = jax.random.uniform(kb, (1, fan_out), jnp.float32, -bound, bound)
        return w, b

    wt, bt = lin(ks[0], TEXT_DIM, HIDDEN_DIM)
    wi, bi = lin(ks[1], IMG_DIM, HIDDEN_DIM)
    ww, bw = lin(ks[2], 2 * HIDDEN_DIM, HIDDEN_DIM)
    wc1, bc1 = lin(ks[3], HIDDEN_DIM, CLS_HIDDEN_DIM)
    wc2, bc2 = lin(ks[4], CLS_HIDDEN_DIM, NUM_CLASSES)
    return {
        "wt": wt, "bt": bt,
        "wi": wi, "bi": bi,
        "ww": ww, "bw": bw,
        "wc1": wc1, "bc1": bc1,
        "wc2": wc2, "bc2": bc2,
    }


if __name__ == "__main__":
    key = jax.random.PRNGKey(0)
    k_txt, k_img, k_p = jax.random.split(key, 3)

    # Synthetic backbone outputs (BERT CLS feature, ResNet pooled feature).
    txt_feat = jax.random.normal(k_txt, (BATCH, TEXT_DIM), jnp.float32)
    img_feat = jax.random.normal(k_img, (BATCH, IMG_DIM), jnp.float32)
    params = init_params(k_p)

    # Weight packing hoisted out of the per-call path: one device-resident
    # buffer, reused for every forward call.
    w_pack = jax.block_until_ready(pack_params(params))

    logits = tim_forward(txt_feat, img_feat, w_pack)
    logits = jax.block_until_ready(logits)

    ref = reference_forward(txt_feat, img_feat, params)
    assert logits.shape == (BATCH, NUM_CLASSES)
    err = float(jnp.max(jnp.abs(logits - ref)))
    # bf16 MXU operands vs. f32 reference -> looser tolerance than the old
    # bit-tight f32 check.
    assert jnp.allclose(logits, ref, atol=5e-2, rtol=5e-2), f"mismatch, max err {err}"

    print("KERNEL_OK")
</pallas_src>

<mosaic_0001>
module attributes {stable_mosaic.version = 11 : i64} {
  func.func @tim_kernel(%arg0: i32, %arg1: memref<8x32xbf16, #tpu.memory_space<vmem>>, %arg2: memref<8x64xbf16, #tpu.memory_space<vmem>>, %arg3: memref<688x128xbf16, #tpu.memory_space<vmem>>, %arg4: memref<8x128xbf16, #tpu.memory_space<vmem>>) attributes {dimension_semantics = [#tpu.dimension_semantics<parallel>], iteration_bounds = array<i64: 1>, scalar_prefetch = 0 : i64, scratch_operands = 0 : i64, tpu.core_type = #tpu.core_type<tc>, window_params = [{transform_indices = @transform_0, window_bounds = array<i64: 8, 32>}, {transform_indices = @transform_1, window_bounds = array<i64: 8, 64>}, {pipeline_mode = #tpu.pipeline_mode<synchronous>, transform_indices = @transform_2, window_bounds = array<i64: 688, 128>}, {transform_indices = @transform_3, window_bounds = array<i64: 8, 128>}]} {
    %c0 = arith.constant 0 : index
    %c0_0 = arith.constant 0 : index
    %0 = vector.load %arg1[%c0, %c0_0] : memref<8x32xbf16, #tpu.memory_space<vmem>>, vector<8x32xbf16>
    %c0_1 = arith.constant 0 : index
    %c0_2 = arith.constant 0 : index
    %1 = vector.load %arg2[%c0_1, %c0_2] : memref<8x64xbf16, #tpu.memory_space<vmem>>, vector<8x64xbf16>
    %c0_3 = arith.constant 0 : index
    %c0_4 = arith.constant 0 : index
    %2 = vector.load %arg3[%c0_3, %c0_4] : memref<688x128xbf16, #tpu.memory_space<vmem>>, vector<32x128xbf16>
    %c32 = arith.constant 32 : index
    %c0_5 = arith.constant 0 : index
    %3 = vector.load %arg3[%c32, %c0_5] : memref<688x128xbf16, #tpu.memory_space<vmem>>, vector<64x128xbf16>
    %c608 = arith.constant 608 : index
    %c0_6 = arith.constant 0 : index
    %4 = vector.load %arg3[%c608, %c0_6] : memref<688x128xbf16, #tpu.memory_space<vmem>>, vector<1x128xbf16>
    %5 = arith.extf %4 : vector<1x128xbf16> to vector<1x128xf32>
    %c624 = arith.constant 624 : index
    %c0_7 = arith.constant 0 : index
    %6 = vector.load %arg3[%c624, %c0_7] : memref<688x128xbf16, #tpu.memory_space<vmem>>, vector<1x128xbf16>
    %7 = arith.extf %6 : vector<1x128xbf16> to vector<1x128xf32>
    %cst = arith.constant dense<0.000000e+00> : vector<8x128xf32>
    %8 = tpu.matmul %0, %2, %cst {dimension_numbers = #tpu.dot_dimension_numbers<[1], [0], [0], [1], [0, 0, 1, 1], [], []>} : vector<8x32xbf16>, vector<32x128xbf16>, vector<8x128xf32> -> vector<8x128xf32>
    %9 = vector.broadcast %5 : vector<1x128xf32> to vector<8x128xf32>
    %10 = arith.addf %8, %9 : vector<8x128xf32>
    %cst_8 = arith.constant dense<0.000000e+00> : vector<8x128xf32>
    %11 = tpu.matmul %1, %3, %cst_8 {dimension_numbers = #tpu.dot_dimension_numbers<[1], [0], [0], [1], [0, 0, 1, 1], [], []>} : vector<8x64xbf16>, vector<64x128xbf16>, vector<8x128xf32> -> vector<8x128xf32>
    %12 = vector.broadcast %7 : vector<1x128xf32> to vector<8x128xf32>
    %13 = arith.addf %11, %12 : vector<8x128xf32>
    %c96 = arith.constant 96 : index
    %c0_9 = arith.constant 0 : index
    %14 = vector.load %arg3[%c96, %c0_9] : memref<688x128xbf16, #tpu.memory_space<vmem>>, vector<128x128xbf16>
    %c224 = arith.constant 224 : index
    %c0_10 = arith.constant 0 : index
    %15 = vector.load %arg3[%c224, %c0_10] : memref<688x128xbf16, #tpu.memory_space<vmem>>, vector<128x128xbf16>
    %c640 = arith.constant 640 : index
    %c0_11 = arith.constant 0 : index
    %16 = vector.load %arg3[%c640, %c0_11] : memref<688x128xbf16, #tpu.memory_space<vmem>>, vector<1x128xbf16>
    %17 = arith.extf %16 : vector<1x128xbf16> to vector<1x128xf32>
    %18 = arith.truncf %10 : vector<8x128xf32> to vector<8x128xbf16>
    %cst_12 = arith.constant dense<0.000000e+00> : vector<8x128xf32>
    %19 = tpu.matmul %18, %14, %cst_12 {dimension_numbers = #tpu.dot_dimension_numbers<[1], [0], [0], [1], [0, 0, 1, 1], [], []>} : vector<8x128xbf16>, vector<128x128xbf16>, vector<8x128xf32> -> vector<8x128xf32>
    %20 = arith.truncf %13 : vector<8x128xf32> to vector<8x128xbf16>
    %cst_13 = arith.constant dense<0.000000e+00> : vector<8x128xf32>
    %21 = tpu.matmul %20, %15, %cst_13 {dimension_numbers = #tpu.dot_dimension_numbers<[1], [0], [0], [1], [0, 0, 1, 1], [], []>} : vector<8x128xbf16>, vector<128x128xbf16>, vector<8x128xf32> -> vector<8x128xf32>
    %22 = arith.addf %19, %21 : vector<8x128xf32>
    %23 = vector.broadcast %17 : vector<1x128xf32> to vector<8x128xf32>
    %24 = arith.addf %22, %23 : vector<8x128xf32>
    %25 = arith.negf %24 : vector<8x128xf32>
    %26 = math.exp %25 : vector<8x128xf32>
    %cst_14 = arith.constant 1.000000e+00 : f32
    %27 = vector.broadcast %cst_14 : f32 to vector<8x128xf32>
    %28 = arith.addf %27, %26 : vector<8x128xf32>
    %29 = arith.divf %27, %28 : vector<8x128xf32>
    %30 = arith.subf %10, %13 : vector<8x128xf32>
    %31 = arith.mulf %29, %30 : vector<8x128xf32>
    %32 = arith.addf %13, %31 : vector<8x128xf32>
    %c352 = arith.constant 352 : index
    %c0_15 = arith.constant 0 : index
    %33 = vector.load %arg3[%c352, %c0_15] : memref<688x128xbf16, #tpu.memory_space<vmem>>, vector<128x128xbf16>
    %c656 = arith.constant 656 : index
    %c0_16 = arith.constant 0 : index
    %34 = vector.load %arg3[%c656, %c0_16] : memref<688x128xbf16, #tpu.memory_space<vmem>>, vector<1x128xbf16>
    %35 = arith.extf %34 : vector<1x128xbf16> to vector<1x128xf32>
    %36 = arith.truncf %32 : vector<8x128xf32> to vector<8x128xbf16>
    %cst_17 = arith.constant dense<0.000000e+00> : vector<8x128xf32>
    %37 = tpu.matmul %36, %33, %cst_17 {dimension_numbers = #tpu.dot_dimension_numbers<[1], [0], [0], [1], [0, 0, 1, 1], [], []>} : vector<8x128xbf16>, vector<128x128xbf16>, vector<8x128xf32> -> vector<8x128xf32>
    %38 = vector.broadcast %35 : vector<1x128xf32> to vector<8x128xf32>
    %39 = arith.addf %37, %38 : vector<8x128xf32>
    %cst_18 = arith.constant 0.00999999977 : f32
    %40 = vector.broadcast %cst_18 : f32 to vector<8x128xf32>
    %41 = arith.mulf %40, %39 : vector<8x128xf32>
    %42 = arith.maximumf %39, %41 : vector<8x128xf32>
    %c480 = arith.constant 480 : index
    %c0_19 = arith.constant 0 : index
    %43 = vector.load %arg3[%c480, %c0_19] : memref<688x128xbf16, #tpu.memory_space<vmem>>, vector<128x128xbf16>
    %c672 = arith.constant 672 : index
    %c0_20 = arith.constant 0 : index
    %44 = vector.load %arg3[%c672, %c0_20] : memref<688x128xbf16, #tpu.memory_space<vmem>>, vector<1x128xbf16>
    %45 = arith.extf %44 : vector<1x128xbf16> to vector<1x128xf32>
    %46 = arith.truncf %42 : vector<8x128xf32> to vector<8x128xbf16>
    %cst_21 = arith.constant dense<0.000000e+00> : vector<8x128xf32>
    %47 = tpu.matmul %46, %43, %cst_21 {dimension_numbers = #tpu.dot_dimension_numbers<[1], [0], [0], [1], [0, 0, 1, 1], [], []>} : vector<8x128xbf16>, vector<128x128xbf16>, vector<8x128xf32> -> vector<8x128xf32>
    %48 = vector.broadcast %45 : vector<1x128xf32> to vector<8x128xf32>
    %49 = arith.addf %47, %48 : vector<8x128xf32>
    %50 = arith.truncf %49 : vector<8x128xf32> to vector<8x128xbf16>
    %c0_22 = arith.constant 0 : index
    %c0_23 = arith.constant 0 : index
    %51 = vector.load %arg4[%c0_22, %c0_23] : memref<8x128xbf16, #tpu.memory_space<vmem>>, vector<8x128xbf16>
    tpu.vector_store %arg4[%c0_22, %c0_23], %50 {strides = array<i32>} : memref<8x128xbf16, #tpu.memory_space<vmem>>, vector<8x128xbf16>,
    return
  }
  func.func @transform_0(%arg0: i32) -> (i32, i32) {
    %c0_i32 = arith.constant 0 : i32
    %c0_i32_0 = arith.constant 0 : i32
    return %arg0, %c0_i32 : i32, i32
  }
  func.func @transform_1(%arg0: i32) -> (i32, i32) {
    %c0_i32 = arith.constant 0 : i32
    %c0_i32_0 = arith.constant 0 : i32
    return %arg0, %c0_i32 : i32, i32
  }
  func.func @transform_2(%arg0: i32) -> (i32, i32) {
    %c0_i32 = arith.constant 0 : i32
    %c0_i32_0 = arith.constant 0 : i32
    %c0_i32_1 = arith.constant 0 : i32
    return %c0_i32, %c0_i32_0 : i32, i32
  }
  func.func @transform_3(%arg0: i32) -> (i32, i32) {
    %c0_i32 = arith.constant 0 : i32
    %c0_i32_0 = arith.constant 0 : i32
    return %arg0, %c0_i32 : i32, i32
  }
}

</mosaic_0001>

<llo_original>
// kernel: _tim_forward_impl.1
$region0: #{_tim_forward_impl.1}
  #allocation0 [shape = 'u32[]', space=smem, size = 0x4, offset = 0x4, fixed_abs, tag = 'smem constant byte address 0x4 - core index']
  #allocation1 [shape = 'u32[144,128]{1,0:T(1,128)}', space=vmem, size = 0x12000, scoped, tag = 'internal scratch']
  %s0 = inlined_call_operand.vmem [shape: bf16[8,32], index: 0, kind: input, shape index: {}]
  %s1 = inlined_call_operand.vmem [shape: bf16[8,64], index: 1, kind: input, shape index: {}]
  %s2 = inlined_call_operand.hbm [shape: bf16[688,128], index: 2, kind: input, shape index: {}]
  %s3 = inlined_call_operand.vmem [shape: bf16[8,128], index: 3, kind: output, shape index: {}]
  %s4 = sld [smem:[#allocation0]]
  $region26: #{_tim_forward_impl.1} parent=0
    _
  %s6 = ssub.s32 1, %s4
  %s7 = scalar_select 0, %s6, %s4
  $region1: #{_tim_forward_impl.1} parent=0
    #allocation2 [shape = 'u8[176128]{0}', space=vmem, size = 0x2b000, scoped, tag = 'input window, operand 2, single buffered']
    #allocation3 [shape = 's32[1]{0}', space=sflag, size = 0x4, scoped, tag = 'scoped memory for _tim_forward_impl.1']
    %8 = vsyncpa [#allocation3], 0
    // Predicated region
    $region2: #{_tim_forward_impl.1} parent=1 // pred_check
      _
    $region3: #{_tim_forward_impl.1} parent=1 // pred_check_branch
      %10 = sbr.rel (0) target = $region5
    $region4: #{_tim_forward_impl.1} parent=1 // pred_region
      _
    $region5: #{_tim_forward_impl.1} parent=1 // pred_fallthru
      _
    // Predicated region
    $region6: #{_tim_forward_impl.1} parent=1 // pred_check
      _
    $region7: #{_tim_forward_impl.1} parent=1 // pred_check_branch
      %12 = sbr.rel (0) target = $region9
    $region8: #{_tim_forward_impl.1} parent=1 // pred_region
      _
    $region9: #{_tim_forward_impl.1} parent=1 // pred_fallthru
      _
    // Predicated region
    $region10: #{_tim_forward_impl.1} parent=1 // pred_check
      _
    $region11: #{_tim_forward_impl.1} parent=1 // pred_check_branch
      %14 = sbr.rel (0) target = $region13
    $region12: #{_tim_forward_impl.1} parent=1 // pred_region
      %s16 = ssub.s32 5504, 5504
      %17 = vsyncadd [#allocation3], %s16
      %s18 = sshll.u32 [#allocation2], 4
      %s19 = int_to_ptr.vmem [resolvable:$true] %s18
      %24 = dma.hbm_to_vmem [thread:$0]  %s2, 5504, %s19, [#allocation3], 64, 64, 4
    $region13: #{_tim_forward_impl.1} parent=1 // pred_fallthru
      _
    // Predicated region
    $region14: #{_tim_forward_impl.1} parent=1 // pred_check
      _
    $region15: #{_tim_forward_impl.1} parent=1 // pred_check_branch
      %26 = sbr.rel (0) target = $region17
    $region16: #{_tim_forward_impl.1} parent=1 // pred_region
      %27 = dma.done [#allocation3], 5504
    $region17: #{_tim_forward_impl.1} parent=1 // pred_fallthru
      _
    %v29 = vld [vmem:[%s0] sm:$0xf]
    %v30 = vld [vmem:[%s1] sm:$0xf]
    %v31 = vld [vmem:[#allocation2] sm:$0xf]
    %v32 = vld [vmem:[#allocation2 + $0x4] sm:$0xf]
    %v33 = vld [vmem:[#allocation2 + $0x8] sm:$0xf]
    %v34 = vld [vmem:[#allocation2 + $0xc] sm:$0xf]
    %v35 = vld [vmem:[#allocation2 + $0x10] sm:$0xf]
    %v36 = vld [vmem:[#allocation2 + $0x14] sm:$0xf]
    %v37 = vld [vmem:[#allocation2 + $0x18] sm:$0xf]
    %v38 = vld [vmem:[#allocation2 + $0x1c] sm:$0xf]
    %v39 = vld [vmem:[#allocation2 + $0x20] sm:$0xf]
    %v40 = vld [vmem:[#allocation2 + $0x24] sm:$0xf]
    %v41 = vld [vmem:[#allocation2 + $0x28] sm:$0xf]
    %v42 = vld [vmem:[#allocation2 + $0x2c] sm:$0xf]
    %v43 = vld [vmem:[#allocation2 + $0x130] sm:$0x1]
    %v44 = vunpack.c.l.bf16 %v43
    %v45 = vld [vmem:[#allocation2 + $0x138] sm:$0x1]
    %v46 = vunpack.c.l.bf16 %v45
    %v47 = vlaneseq
    %v48 = vshrl.u32 %v47, 7
    %v49 = vsub.s32 0, %v48
    %v50 = vrot.slane %v44, %v49
    %v55 = vunpack.c.l.b16 %v31
    %v56 = vunpack.c.l.b16 %v32
    %v57 = vunpack.c.l.b16 %v33
    %v58 = vunpack.c.l.b16 %v34
    %v59 = vpack.c.b16 %v56, %v55
    %v60 = vpack.c.b16 %v58, %v57
    %vm63 = vcmask 261120
    %v65 = vsel %vm63, %v29, 0
    %67 = vmatprep.subr.bf16.mxu0 0
    %68 = vmatpush1.bf16.msra.mxu0 %v59
    %69 = vmatprep.subr.bf16.mxu0 0
    %70 = vmatpush1.bf16.msra.mxu0 %v60
    %71 = vmatprep.subr.bf16.mxu0 0
    %72 = vmatpush1.bf16.msra.mxu0 0
    %73 = vmatprep.subr.bf16.mxu0 0
    %74 = vmatpush1.bf16.msra.mxu0 0
    %75 = vmatprep.subr.bf16.mxu0 0
    %76 = vmatpush1.bf16.msra.mxu0 0
    %77 = vmatprep.subr.bf16.mxu0 0
    %78 = vmatpush1.bf16.msra.mxu0 0
    %79 = vmatprep.subr.bf16.mxu0 0
    %80 = vmatpush1.bf16.msra.mxu0 0
    %81 = vmatprep.subr.bf16.mxu0 0
    %82 = vmatpush1.bf16.msra.mxu0 0
    %83 = vmatprep.subr.bf16.mxu0 0
    %84 = vmatpush1.bf16.msra.mxu0 0
    %85 = vmatprep.subr.bf16.mxu0 0
    %86 = vmatpush1.bf16.msra.mxu0 0
    %87 = vmatprep.subr.bf16.mxu0 0
    %88 = vmatpush1.bf16.msra.mxu0 0
    %89 = vmatprep.subr.bf16.mxu0 0
    %90 = vmatpush1.bf16.msra.mxu0 0
    %91 = vmatprep.subr.bf16.mxu0 0
    %92 = vmatpush1.bf16.msra.mxu0 0
    %93 = vmatprep.subr.bf16.mxu0 0
    %94 = vmatpush1.bf16.msra.mxu0 0
    %95 = vmatprep.subr.bf16.mxu0 0
    %96 = vmatpush1.bf16.msra.mxu0 0
    %97 = vmatprep.subr.bf16.mxu0 0
    %98 = vmatpush1.bf16.msra.mxu0 0
    %99 = vmatprep.mubr.bf16.mxu0 0
    %100 = vmatmul.mubr.bf16.gmra.mrb[0].mxu0 %v65
    %v101 = vpop.f32.mrb[0].mxu0
    %v102 = vadd.f32 %v50, %v101
    %v103 = vpop.f32.mrb[0].mxu0
    %v104 = vpop.f32.mrb[0].mxu0
    %v105 = vpop.f32.mrb[0].mxu0
    %106 = vdwg.mxu0
    %v107 = vlaneseq
    %v108 = vshrl.u32 %v107, 7
    %v109 = vsub.s32 0, %v108
    %v110 = vrot.slane %v46, %v109
    %v119 = vunpack.c.l.b16 %v35
    %v120 = vunpack.c.l.b16 %v36
    %v121 = vunpack.c.l.b16 %v37
    %v122 = vunpack.c.l.b16 %v38
    %v123 = vunpack.c.l.b16 %v39
    %v124 = vunpack.c.l.b16 %v40
    %v125 = vunpack.c.l.b16 %v41
    %v126 = vunpack.c.l.b16 %v42
    %v127 = vpack.c.b16 %v120, %v119
    %v128 = vpack.c.b16 %v122, %v121
    %v129 = vpack.c.b16 %v124, %v123
    %v130 = vpack.c.b16 %v126, %v125
    %vm135 = vcmask 523264
    %v137 = vsel %vm135, %v30, 0
    %139 = vmatprep.subr.bf16.mxu0 0
    %140 = vmatpush1.bf16.msra.mxu0 %v127
    %141 = vmatprep.subr.bf16.mxu0 0
    %142 = vmatpush1.bf16.msra.mxu0 %v128
    %143 = vmatprep.subr.bf16.mxu0 0
    %144 = vmatpush1.bf16.msra.mxu0 %v129
    %145 = vmatprep.subr.bf16.mxu0 0
    %146 = vmatpush1.bf16.msra.mxu0 %v130
    %147 = vmatprep.subr.bf16.mxu0 0
    %148 = vmatpush1.bf16.msra.mxu0 0
    %149 = vmatprep.subr.bf16.mxu0 0
    %150 = vmatpush1.bf16.msra.mxu0 0
    %151 = vmatprep.subr.bf16.mxu0 0
    %152 = vmatpush1.bf16.msra.mxu0 0
    %153 = vmatprep.subr.bf16.mxu0 0
    %154 = vmatpush1.bf16.msra.mxu0 0
    %155 = vmatprep.subr.bf16.mxu0 0
    %156 = vmatpush1.bf16.msra.mxu0 0
    %157 = vmatprep.subr.bf16.mxu0 0
    %158 = vmatpush1.bf16.msra.mxu0 0
    %159 = vmatprep.subr.bf16.mxu0 0
    %160 = vmatpush1.bf16.msra.mxu0 0
    %161 = vmatprep.subr.bf16.mxu0 0
    %162 = vmatpush1.bf16.msra.mxu0 0
    %163 = vmatprep.subr.bf16.mxu0 0
    %164 = vmatpush1.bf16.msra.mxu0 0
    %165 = vmatprep.subr.bf16.mxu0 0
    %166 = vmatpush1.bf16.msra.mxu0 0
    %167 = vmatprep.subr.bf16.mxu0 0
    %168 = vmatpush1.bf16.msra.mxu0 0
    %169 = vmatprep.subr.bf16.mxu0 0
    %170 = vmatpush1.bf16.msra.mxu0 0
    %171 = vmatprep.mubr.bf16.mxu0 0
    %172 = vmatmul.mubr.bf16.gmra.mrb[0].mxu0 %v137
    %v173 = vpop.f32.mrb[0].mxu0
    %v174 = vadd.f32 %v110, %v173
    %v175 = vpop.f32.mrb[0].mxu0
    %v176 = vpop.f32.mrb[0].mxu0
    %v177 = vpop.f32.mrb[0].mxu0
    %178 = vdwg.mxu0
    %v179 = vld [vmem:[#allocation2 + $0x30] sm:$0xf]
    %v180 = vld [vmem:[#allocation2 + $0x34] sm:$0xf]
    %v181 = vld [vmem:[#allocation2 + $0x38] sm:$0xf]
    %v182 = vld [vmem:[#allocation2 + $0x3c] sm:$0xf]
    %v183 = vld [vmem:[#allocation2 + $0x40] sm:$0xf]
    %v184 = vld [vmem:[#allocation2 + $0x44] sm:$0xf]
    %v185 = vld [vmem:[#allocation2 + $0x48] sm:$0xf]
    %v186 = vld [vmem:[#allocation2 + $0x4c] sm:$0xf]
    %v187 = vld [vmem:[#allocation2 + $0x50] sm:$0xf]
    %v188 = vld [vmem:[#allocation2 + $0x54] sm:$0xf]
    %v189 = vld [vmem:[#allocation2 + $0x58] sm:$0xf]
    %v190 = vld [vmem:[#allocation2 + $0x5c] sm:$0xf]
    %v191 = vld [vmem:[#allocation2 + $0x60] sm:$0xf]
    %v192 = vld [vmem:[#allocation2 + $0x64] sm:$0xf]
    %v193 = vld [vmem:[#allocation2 + $0x68] sm:$0xf]
    %v194 = vld [vmem:[#allocation2 + $0x6c] sm:$0xf]
    %v195 = vld [vmem:[#allocation2 + $0x70] sm:$0xf]
    %v196 = vld [vmem:[#allocation2 + $0x74] sm:$0xf]
    %v197 = vld [vmem:[#allocation2 + $0x78] sm:$0xf]
    %v198 = vld [vmem:[#allocation2 + $0x7c] sm:$0xf]
    %v199 = vld [vmem:[#allocation2 + $0x80] sm:$0xf]
    %v200 = vld [vmem:[#allocation2 + $0x84] sm:$0xf]
    %v201 = vld [vmem:[#allocation2 + $0x88] sm:$0xf]
    %v202 = vld [vmem:[#allocation2 + $0x8c] sm:$0xf]
    %v203 = vld [vmem:[#allocation2 + $0x90] sm:$0xf]
    %v204 = vld [vmem:[#allocation2 + $0x94] sm:$0xf]
    %v205 = vld [vmem:[#allocation2 + $0x98] sm:$0xf]
    %v206 = vld [vmem:[#allocation2 + $0x9c] sm:$0xf]
    %v207 = vld [vmem:[#allocation2 + $0xa0] sm:$0xf]
    %v208 = vld [vmem:[#allocation2 + $0xa4] sm:$0xf]
    %v209 = vld [vmem:[#allocation2 + $0xa8] sm:$0xf]
    %v210 = vld [vmem:[#allocation2 + $0xac] sm:$0xf]
    %v211 = vld [vmem:[#allocation2 + $0x140] sm:$0x1]
    %v212 = vunpack.c.l.bf16 %v211
    %v213 = vpack.c.bf16 %v102, %v102
    %v214 = vpack.c.bf16 %v174, %v174
    %v231 = vunpack.c.l.b16 %v195
    %v232 = vunpack.c.l.b16 %v196
    %v233 = vunpack.c.l.b16 %v197
    %v234 = vunpack.c.l.b16 %v198
    %v235 = vunpack.c.l.b16 %v199
    %v236 = vunpack.c.l.b16 %v200
    %v237 = vunpack.c.l.b16 %v201
    %v238 = vunpack.c.l.b16 %v202
    %v239 = vunpack.c.l.b16 %v203
    %v240 = vunpack.c.l.b16 %v204
    %v241 = vunpack.c.l.b16 %v205
    %v242 = vunpack.c.l.b16 %v206
    %v243 = vunpack.c.l.b16 %v207
    %v244 = vunpack.c.l.b16 %v208
    %v245 = vunpack.c.l.b16 %v209
    %v246 = vunpack.c.l.b16 %v210
    %v247 = vpack.c.b16 %v232, %v231
    %v248 = vpack.c.b16 %v234, %v233
    %v249 = vpack.c.b16 %v236, %v235
    %v250 = vpack.c.b16 %v238, %v237
    %v251 = vpack.c.b16 %v240, %v239
    %v252 = vpack.c.b16 %v242, %v241
    %v253 = vpack.c.b16 %v244, %v243
    %v254 = vpack.c.b16 %v246, %v245
    %263 = vmatprep.subr.bf16.mxu0 0
    %264 = vmatpush1.bf16.msra.mxu0 %v247
    %265 = vmatprep.subr.bf16.mxu0 0
    %266 = vmatpush1.bf16.msra.mxu0 %v248
    %267 = vmatprep.subr.bf16.mxu0 0
    %268 = vmatpush1.bf16.msra.mxu0 %v249
    %269 = vmatprep.subr.bf16.mxu0 0
    %270 = vmatpush1.bf16.msra.mxu0 %v250
    %271 = vmatprep.subr.bf16.mxu0 0
    %272 = vmatpush1.bf16.msra.mxu0 %v251
    %273 = vmatprep.subr.bf16.mxu0 0
    %274 = vmatpush1.bf16.msra.mxu0 %v252
    %275 = vmatprep.subr.bf16.mxu0 0
    %276 = vmatpush1.bf16.msra.mxu0 %v253
    %277 = vmatprep.subr.bf16.mxu0 0
    %278 = vmatpush1.bf16.msra.mxu0 %v254
    %279 = vmatprep.subr.bf16.mxu0 0
    %280 = vmatpush1.bf16.msra.mxu0 0
    %281 = vmatprep.subr.bf16.mxu0 0
    %282 = vmatpush1.bf16.msra.mxu0 0
    %283 = vmatprep.subr.bf16.mxu0 0
    %284 = vmatpush1.bf16.msra.mxu0 0
    %285 = vmatprep.subr.bf16.mxu0 0
    %286 = vmatpush1.bf16.msra.mxu0 0
    %287 = vmatprep.subr.bf16.mxu0 0
    %288 = vmatpush1.bf16.msra.mxu0 0
    %289 = vmatprep.subr.bf16.mxu0 0
    %290 = vmatpush1.bf16.msra.mxu0 0
    %291 = vmatprep.subr.bf16.mxu0 0
    %292 = vmatpush1.bf16.msra.mxu0 0
    %293 = vmatprep.subr.bf16.mxu0 0
    %294 = vmatpush1.bf16.msra.mxu0 0
    %295 = vmatprep.mubr.bf16.mxu0 0
    %296 = vmatmul.mubr.bf16.gmra.mrb[0].mxu0 %v214
    %v297 = vpop.f32.mrb[0].mxu0
    %v298 = vadd.f32 0.0, %v297
    %v299 = vpop.f32.mrb[0].mxu0
    %v300 = vpop.f32.mrb[0].mxu0
    %v301 = vpop.f32.mrb[0].mxu0
    %302 = vdwg.mxu0
    %v319 = vunpack.c.l.b16 %v179
    %v320 = vunpack.c.l.b16 %v180
    %v321 = vunpack.c.l.b16 %v181
    %v322 = vunpack.c.l.b16 %v182
    %v323 = vunpack.c.l.b16 %v183
    %v324 = vunpack.c.l.b16 %v184
    %v325 = vunpack.c.l.b16 %v185
    %v326 = vunpack.c.l.b16 %v186
    %v327 = vunpack.c.l.b16 %v187
    %v328 = vunpack.c.l.b16 %v188
    %v329 = vunpack.c.l.b16 %v189
    %v330 = vunpack.c.l.b16 %v190
    %v331 = vunpack.c.l.b16 %v191
    %v332 = vunpack.c.l.b16 %v192
    %v333 = vunpack.c.l.b16 %v193
    %v334 = vunpack.c.l.b16 %v194
    %v335 = vpack.c.b16 %v320, %v319
    %v336 = vpack.c.b16 %v322, %v321
    %v337 = vpack.c.b16 %v324, %v323
    %v338 = vpack.c.b16 %v326, %v325
    %v339 = vpack.c.b16 %v328, %v327
    %v340 = vpack.c.b16 %v330, %v329
    %v341 = vpack.c.b16 %v332, %v331
    %v342 = vpack.c.b16 %v334, %v333
    %351 = vmatprep.subr.bf16.mxu0 0
    %352 = vmatpush1.bf16.msra.mxu0 %v335
    %353 = vmatprep.subr.bf16.mxu0 0
    %354 = vmatpush1.bf16.msra.mxu0 %v336
    %355 = vmatprep.subr.bf16.mxu0 0
    %356 = vmatpush1.bf16.msra.mxu0 %v337
    %357 = vmatprep.subr.bf16.mxu0 0
    %358 = vmatpush1.bf16.msra.mxu0 %v338
    %359 = vmatprep.subr.bf16.mxu0 0
    %360 = vmatpush1.bf16.msra.mxu0 %v339
    %361 = vmatprep.subr.bf16.mxu0 0
    %362 = vmatpush1.bf16.msra.mxu0 %v340
    %363 = vmatprep.subr.bf16.mxu0 0
    %364 = vmatpush1.bf16.msra.mxu0 %v341
    %365 = vmatprep.subr.bf16.mxu0 0
    %366 = vmatpush1.bf16.msra.mxu0 %v342
    %367 = vmatprep.subr.bf16.mxu0 0
    %368 = vmatpush1.bf16.msra.mxu0 0
    %369 = vmatprep.subr.bf16.mxu0 0
    %370 = vmatpush1.bf16.msra.mxu0 0
    %371 = vmatprep.subr.bf16.mxu0 0
    %372 = vmatpush1.bf16.msra.mxu0 0
    %373 = vmatprep.subr.bf16.mxu0 0
    %374 = vmatpush1.bf16.msra.mxu0 0
    %375 = vmatprep.subr.bf16.mxu0 0
    %376 = vmatpush1.bf16.msra.mxu0 0
    %377 = vmatprep.subr.bf16.mxu0 0
    %378 = vmatpush1.bf16.msra.mxu0 0
    %379 = vmatprep.subr.bf16.mxu0 0
    %380 = vmatpush1.bf16.msra.mxu0 0
    %381 = vmatprep.subr.bf16.mxu0 0
    %382 = vmatpush1.bf16.msra.mxu0 0
    %383 = vmatprep.mubr.bf16.mxu0 0
    %384 = vmatmul.mubr.bf16.gmra.mrb[0].mxu0 %v213
    %v385 = vpop.f32.mrb[0].mxu0
    %v386 = vadd.f32 %v298, %v385
    %v387 = vpop.f32.mrb[0].mxu0
    %v388 = vpop.f32.mrb[0].mxu0
    %v389 = vpop.f32.mrb[0].mxu0
    %390 = vdwg.mxu0
    %v391 = vlaneseq
    %v392 = vshrl.u32 %v391, 7
    %v393 = vsub.s32 0, %v392
    %v394 = vrot.slane %v212, %v393
    %v395 = vadd.f32 %v386, %v394
    %v396 = vxor.u32 %v395, 2147483648
    %v397 = vmul.f32 %v396, 1.442695
    %v398 = vpow.pop %v397
    %v399 = vadd.f32 %v398, 1.0
    %v400 = vrcp.pop %v399
    %v401 = vmul.f32 1.0, %v400
    %v402 = vsub.f32 %v102, %v174
    %v403 = vmul.f32 %v401, %v402
    %v404 = vadd.f32 %v174, %v403
    %v405 = vld [vmem:[#allocation2 + $0xb0] sm:$0xf]
    %v406 = vld [vmem:[#allocation2 + $0xb4] sm:$0xf]
    %v407 = vld [vmem:[#allocation2 + $0xb8] sm:$0xf]
    %v408 = vld [vmem:[#allocation2 + $0xbc] sm:$0xf]
    %v409 = vld [vmem:[#allocation2 + $0xc0] sm:$0xf]
    %v410 = vld [vmem:[#allocation2 + $0xc4] sm:$0xf]
    %v411 = vld [vmem:[#allocation2 + $0xc8] sm:$0xf]
    %v412 = vld [vmem:[#allocation2 + $0xcc] sm:$0xf]
    %v413 = vld [vmem:[#allocation2 + $0xd0] sm:$0xf]
    %v414 = vld [vmem:[#allocation2 + $0xd4] sm:$0xf]
    %v415 = vld [vmem:[#allocation2 + $0xd8] sm:$0xf]
    %v416 = vld [vmem:[#allocation2 + $0xdc] sm:$0xf]
    %v417 = vld [vmem:[#allocation2 + $0xe0] sm:$0xf]
    %v418 = vld [vmem:[#allocation2 + $0xe4] sm:$0xf]
    %v419 = vld [vmem:[#allocation2 + $0xe8] sm:$0xf]
    %v420 = vld [vmem:[#allocation2 + $0xec] sm:$0xf]
    %v421 = vld [vmem:[#allocation2 + $0x148] sm:$0x1]
    %v422 = vunpack.c.l.bf16 %v421
    %v423 = vpack.c.bf16 %v404, %v404
    %v424 = vlaneseq
    %v425 = vshrl.u32 %v424, 7
    %v426 = vsub.s32 0, %v425
    %v427 = vrot.slane %v422, %v426
    %v444 = vunpack.c.l.b16 %v405
    %v445 = vunpack.c.l.b16 %v406
    %v446 = vunpack.c.l.b16 %v407
    %v447 = vunpack.c.l.b16 %v408
    %v448 = vunpack.c.l.b16 %v409
    %v449 = vunpack.c.l.b16 %v410
    %v450 = vunpack.c.l.b16 %v411
    %v451 = vunpack.c.l.b16 %v412
    %v452 = vunpack.c.l.b16 %v413
    %v453 = vunpack.c.l.b16 %v414
    %v454 = vunpack.c.l.b16 %v415
    %v455 = vunpack.c.l.b16 %v416
    %v456 = vunpack.c.l.b16 %v417
    %v457 = vunpack.c.l.b16 %v418
    %v458 = vunpack.c.l.b16 %v419
    %v459 = vunpack.c.l.b16 %v420
    %v460 = vpack.c.b16 %v445, %v444
    %v461 = vpack.c.b16 %v447, %v446
    %v462 = vpack.c.b16 %v449, %v448
    %v463 = vpack.c.b16 %v451, %v450
    %v464 = vpack.c.b16 %v453, %v452
    %v465 = vpack.c.b16 %v455, %v454
    %v466 = vpack.c.b16 %v457, %v456
    %v467 = vpack.c.b16 %v459, %v458
    %476 = vmatprep.subr.bf16.mxu0 0
    %477 = vmatpush1.bf16.msra.mxu0 %v460
    %478 = vmatprep.subr.bf16.mxu0 0
    %479 = vmatpush1.bf16.msra.mxu0 %v461
    %480 = vmatprep.subr.bf16.mxu0 0
    %481 = vmatpush1.bf16.msra.mxu0 %v462
    %482 = vmatprep.subr.bf16.mxu0 0
    %483 = vmatpush1.bf16.msra.mxu0 %v463
    %484 = vmatprep.subr.bf16.mxu0 0
    %485 = vmatpush1.bf16.msra.mxu0 %v464
    %486 = vmatprep.subr.bf16.mxu0 0
    %487 = vmatpush1.bf16.msra.mxu0 %v465
    %488 = vmatprep.subr.bf16.mxu0 0
    %489 = vmatpush1.bf16.msra.mxu0 %v466
    %490 = vmatprep.subr.bf16.mxu0 0
    %491 = vmatpush1.bf16.msra.mxu0 %v467
    %492 = vmatprep.subr.bf16.mxu0 0
    %493 = vmatpush1.bf16.msra.mxu0 0
    %494 = vmatprep.subr.bf16.mxu0 0
    %495 = vmatpush1.bf16.msra.mxu0 0
    %496 = vmatprep.subr.bf16.mxu0 0
    %497 = vmatpush1.bf16.msra.mxu0 0
    %498 = vmatprep.subr.bf16.mxu0 0
    %499 = vmatpush1.bf16.msra.mxu0 0
    %500 = vmatprep.subr.bf16.mxu0 0
    %501 = vmatpush1.bf16.msra.mxu0 0
    %502 = vmatprep.subr.bf16.mxu0 0
    %503 = vmatpush1.bf16.msra.mxu0 0
    %504 = vmatprep.subr.bf16.mxu0 0
    %505 = vmatpush1.bf16.msra.mxu0 0
    %506 = vmatprep.subr.bf16.mxu0 0
    %507 = vmatpush1.bf16.msra.mxu0 0
    %508 = vmatprep.mubr.bf16.mxu0 0
    %509 = vmatmul.mubr.bf16.gmra.mrb[0].mxu0 %v423
    %v510 = vpop.f32.mrb[0].mxu0
    %v511 = vadd.f32 %v427, %v510
    %v512 = vpop.f32.mrb[0].mxu0
    %v513 = vpop.f32.mrb[0].mxu0
    %v514 = vpop.f32.mrb[0].mxu0
    %515 = vdwg.mxu0
    %v516 = vmul.f32 %v511, 0.01
    %v517 = vmax.f32 %v511, %v516
    %v518 = vld [vmem:[#allocation2 + $0xf0] sm:$0xf]
    %v519 = vld [vmem:[#allocation2 + $0xf4] sm:$0xf]
    %v520 = vld [vmem:[#allocation2 + $0xf8] sm:$0xf]
    %v521 = vld [vmem:[#allocation2 + $0xfc] sm:$0xf]
    %v522 = vld [vmem:[#allocation2 + $0x100] sm:$0xf]
    %v523 = vld [vmem:[#allocation2 + $0x104] sm:$0xf]
    %v524 = vld [vmem:[#allocation2 + $0x108] sm:$0xf]
    %v525 = vld [vmem:[#allocation2 + $0x10c] sm:$0xf]
    %v526 = vld [vmem:[#allocation2 + $0x110] sm:$0xf]
    %v527 = vld [vmem:[#allocation2 + $0x114] sm:$0xf]
    %v528 = vld [vmem:[#allocation2 + $0x118] sm:$0xf]
    %v529 = vld [vmem:[#allocation2 + $0x11c] sm:$0xf]
    %v530 = vld [vmem:[#allocation2 + $0x120] sm:$0xf]
    %v531 = vld [vmem:[#allocation2 + $0x124] sm:$0xf]
    %v532 = vld [vmem:[#allocation2 + $0x128] sm:$0xf]
    %v533 = vld [vmem:[#allocation2 + $0x12c] sm:$0xf]
    %v534 = vld [vmem:[#allocation2 + $0x150] sm:$0x1]
    %v535 = vunpack.c.l.bf16 %v534
    %v536 = vpack.c.bf16 %v517, %v517
    %v537 = vlaneseq
    %v538 = vshrl.u32 %v537, 7
    %v539 = vsub.s32 0, %v538
    %v540 = vrot.slane %v535, %v539
    %v557 = vunpack.c.l.b16 %v518
    %v558 = vunpack.c.l.b16 %v519
    %v559 = vunpack.c.l.b16 %v520
    %v560 = vunpack.c.l.b16 %v521
    %v561 = vunpack.c.l.b16 %v522
    %v562 = vunpack.c.l.b16 %v523
    %v563 = vunpack.c.l.b16 %v524
    %v564 = vunpack.c.l.b16 %v525
    %v565 = vunpack.c.l.b16 %v526
    %v566 = vunpack.c.l.b16 %v527
    %v567 = vunpack.c.l.b16 %v528
    %v568 = vunpack.c.l.b16 %v529
    %v569 = vunpack.c.l.b16 %v530
    %v570 = vunpack.c.l.b16 %v531
    %v571 = vunpack.c.l.b16 %v532
    %v572 = vunpack.c.l.b16 %v533
    %v573 = vpack.c.b16 %v558, %v557
    %v574 = vpack.c.b16 %v560, %v559
    %v575 = vpack.c.b16 %v562, %v561
    %v576 = vpack.c.b16 %v564, %v563
    %v577 = vpack.c.b16 %v566, %v565
    %v578 = vpack.c.b16 %v568, %v567
    %v579 = vpack.c.b16 %v570, %v569
    %v580 = vpack.c.b16 %v572, %v571
    %589 = vmatprep.subr.bf16.mxu0 0
    %590 = vmatpush1.bf16.msra.mxu0 %v573
    %591 = vmatprep.subr.bf16.mxu0 0
    %592 = vmatpush1.bf16.msra.mxu0 %v574
    %593 = vmatprep.subr.bf16.mxu0 0
    %594 = vmatpush1.bf16.msra.mxu0 %v575
    %595 = vmatprep.subr.bf16.mxu0 0
    %596 = vmatpush1.bf16.msra.mxu0 %v576
    %597 = vmatprep.subr.bf16.mxu0 0
    %598 = vmatpush1.bf16.msra.mxu0 %v577
    %599 = vmatprep.subr.bf16.mxu0 0
    %600 = vmatpush1.bf16.msra.mxu0 %v578
    %601 = vmatprep.subr.bf16.mxu0 0
    %602 = vmatpush1.bf16.msra.mxu0 %v579
    %603 = vmatprep.subr.bf16.mxu0 0
    %604 = vmatpush1.bf16.msra.mxu0 %v580
    %605 = vmatprep.subr.bf16.mxu0 0
    %606 = vmatpush1.bf16.msra.mxu0 0
    %607 = vmatprep.subr.bf16.mxu0 0
    %608 = vmatpush1.bf16.msra.mxu0 0
    %609 = vmatprep.subr.bf16.mxu0 0
    %610 = vmatpush1.bf16.msra.mxu0 0
    %611 = vmatprep.subr.bf16.mxu0 0
    %612 = vmatpush1.bf16.msra.mxu0 0
    %613 = vmatprep.subr.bf16.mxu0 0
    %614 = vmatpush1.bf16.msra.mxu0 0
    %615 = vmatprep.subr.bf16.mxu0 0
    %616 = vmatpush1.bf16.msra.mxu0 0
    %617 = vmatprep.subr.bf16.mxu0 0
    %618 = vmatpush1.bf16.msra.mxu0 0
    %619 = vmatprep.subr.bf16.mxu0 0
    %620 = vmatpush1.bf16.msra.mxu0 0
    %621 = vmatprep.mubr.bf16.mxu0 0
    %622 = vmatmul.mubr.bf16.gmra.mrb[0].mxu0 %v536
    %v623 = vpop.f32.mrb[0].mxu0
    %v624 = vadd.f32 %v540, %v623
    %v625 = vpop.f32.mrb[0].mxu0
    %v626 = vpop.f32.mrb[0].mxu0
    %v627 = vpop.f32.mrb[0].mxu0
    %628 = vdwg.mxu0
    %v629 = vpack.c.bf16 %v624, %v624
    %630 = vst [vmem:[%s3] sm:$0xf] %v629
    // Predicated region
    $region18: #{_tim_forward_impl.1} parent=1 // pred_check
      _
    $region19: #{_tim_forward_impl.1} parent=1 // pred_check_branch
      %632 = sbr.rel (0) target = $region21
    $region20: #{_tim_forward_impl.1} parent=1 // pred_region
      _
    $region21: #{_tim_forward_impl.1} parent=1 // pred_fallthru
      _
    // Predicated region
    $region22: #{_tim_forward_impl.1} parent=1 // pred_check
      _
    $region23: #{_tim_forward_impl.1} parent=1 // pred_check_branch
      %634 = sbr.rel (0) target = $region25
    $region24: #{_tim_forward_impl.1} parent=1 // pred_region
      _
    $region25: #{_tim_forward_impl.1} parent=1 // pred_fallthru
      _
    %635 = vsyncpa [#allocation3], 1

</llo_original>
